<compile_context>
chip_gen: v6e
topology: v6e:2x2x1
jax: 0.10.0
libtpu: 0.0.40
codegen_flags: <defaults>
</compile_context>

<pallas_src>
import functools

import jax
import jax.numpy as jnp
from jax.experimental import pallas as pl
from jax.experimental.pallas import tpu as pltpu


def _ffn_kernel(x_ref, w1_ref, b1_ref, w2_ref, b2_ref, o_ref, acc_ref, *,
                num_h, gelu_approximate, precision):
    """One (row-tile, hidden-chunk) step of the feed-forward block.

    x_ref : (tm, D)   input rows            (compute dtype)
    w1_ref: (D, th)   first-weight chunk    (compute dtype)
    b1_ref: (1, th)   first-bias chunk      (f32)
    w2_ref: (th, D)   second-weight chunk   (compute dtype)
    b2_ref: (1, D)    second bias           (f32)
    o_ref : (tm, D)   output rows           (written at j == num_h - 1)
    acc_ref: (tm, D)  f32 accumulator for the second matmul
    """
    j = pl.program_id(1)

    # Linear 1 (this hidden-dim chunk) on the MXU; f32 accumulation.
    h = jnp.dot(x_ref[...], w1_ref[...],
                preferred_element_type=jnp.float32, precision=precision)
    h = h + b1_ref[...]  # bias is already f32

    if gelu_approximate:
        # tanh-GELU: transcendental runs in the EUP slot (frees the VALU on
        # v6e/v7x).  Slightly different numerics vs torch's exact erf GELU.
        h = jax.nn.gelu(h, approximate=True)
    else:
        # Exact erf-GELU in f32 (matches torch.nn.GELU() default).
        h = 0.5 * h * (1.0 + jax.lax.erf(h * jnp.float32(0.7071067811865476)))

    # Linear 2 partial product for this hidden chunk; f32 accumulation.
    part = jnp.dot(h.astype(w2_ref.dtype), w2_ref[...],
                   preferred_element_type=jnp.float32, precision=precision)

    if num_h == 1:
        # Single hidden chunk: no accumulator round-trip needed.
        o_ref[...] = (part + b2_ref[...]).astype(o_ref.dtype)
    else:
        @pl.when(j == 0)
        def _():
            acc_ref[...] = part

        @pl.when(j != 0)
        def _():
            acc_ref[...] += part

        @pl.when(j == num_h - 1)
        def _():
            o_ref[...] = (acc_ref[...] + b2_ref[...]).astype(o_ref.dtype)


def _round_up(x, m):
    return (x + m - 1) // m * m


def _pick_hidden_tile(H, target):
    """Largest hidden-chunk size <= target that divides H and is MXU-aligned."""
    if H <= target:
        return H
    for mult in (256, 128):  # 256 for v6e/v7x (2x256^2 MXU), 128 for v5e
        cands = [t for t in range(mult, target + 1, mult) if H % t == 0]
        if cands:
            return max(cands)
    return H  # no aligned divisor: keep the weights fully resident


def prepare_params(w1, b1, w2, b2, compute_dtype=jnp.bfloat16):
    """One-time cast of weights to the MXU compute dtype and biases to f32.

    Do this at model-load time, not per call: re-casting f32 weights inside the
    jitted wrapper adds ~3x the weight HBM traffic of the kernel itself.
    """
    return (w1.astype(compute_dtype),
            b1.reshape(1, -1).astype(jnp.float32),
            w2.astype(compute_dtype),
            b2.reshape(1, -1).astype(jnp.float32))


@functools.partial(jax.jit, static_argnames=("tile_m", "hidden_tile",
                                             "gelu_approximate", "precision"))
def feed_forward(x, w1, b1, w2, b2, *, tile_m=512, hidden_tile=2048,
                 gelu_approximate=False, precision=None):
    """GPT-2 FeedForward: Linear(D,4D) -> GELU -> Linear(4D,D).

    x: (..., D); leading dims are flattened into the row axis.
    The MXU input dtype is taken from w1.dtype (use prepare_params to cast the
    weights to bf16 once, outside the per-call path).
    """
    D = x.shape[-1]
    H = w1.shape[-1]
    lead_shape = x.shape[:-1]
    out_dtype = x.dtype
    compute_dtype = w1.dtype

    x2d = x.reshape(-1, D).astype(compute_dtype)
    b1f = b1.reshape(1, H).astype(jnp.float32)
    b2f = b2.reshape(1, D).astype(jnp.float32)

    M = x2d.shape[0]

    # Row tile: MXU-sized, but keep >= 2 row tiles so both v7x TensorCores work.
    tm = _round_up(min(int(tile_m), M), 8)
    if pl.cdiv(M, tm) < 2 and M > 8:
        tm = _round_up(pl.cdiv(M, 2), 8)

    # Hidden-dim chunk: bounds VMEM independent of model width.
    th = _pick_hidden_tile(H, int(hidden_tile))
    grid_h = H // th
    w_bufs = 1 if grid_h == 1 else 2  # constant-index specs are single-buffered

    w_item = jnp.dtype(compute_dtype).itemsize
    o_item = jnp.dtype(out_dtype).itemsize

    def _budget(tm_):
        return int(1.3 * (
            2 * tm_ * D * w_item            # x tile, double-buffered
            + 2 * tm_ * D * o_item          # out tile, double-buffered
            + w_bufs * 2 * D * th * w_item  # W1 + W2 chunks
            + (w_bufs * th + D) * 4         # biases (f32)
            + tm_ * D * 4                   # f32 accumulator scratch
            + 3 * tm_ * th * 4))            # f32 hidden / GELU intermediates

    # Per-core VMEM capacity (128 MiB v5e/v6e, 64 MiB v7x) minus headroom for
    # Mosaic-internal scratch / semaphores.
    try:
        vmem_cap = int(pltpu.get_tpu_info().vmem_capacity_bytes)
    except Exception:  # conservative fallback if the query is unavailable
        vmem_cap = 64 * 1024 * 1024
    vmem_avail = vmem_cap - 16 * 1024 * 1024

    while _budget(tm) > vmem_avail and tm > 64:
        tm = max(64, _round_up(tm // 2, 8))

    grid_m = pl.cdiv(M, tm)
    vmem_bytes = min(vmem_avail, max(_budget(tm), 32 * 1024 * 1024))

    const_mode = dict(pipeline_mode=pl.Buffered(1))   # block index never changes
    w_mode = const_mode if grid_h == 1 else {}        # stream chunks when grid_h > 1

    kernel = functools.partial(_ffn_kernel, num_h=grid_h,
                               gelu_approximate=gelu_approximate,
                               precision=precision)

    out2d = pl.pallas_call(
        kernel,
        out_shape=jax.ShapeDtypeStruct((M, D), out_dtype),
        grid_spec=pltpu.PrefetchScalarGridSpec(
            num_scalar_prefetch=0,
            grid=(grid_m, grid_h),
            in_specs=[
                pl.BlockSpec((tm, D), lambda i, j: (i, 0)),              # X rows
                pl.BlockSpec((D, th), lambda i, j: (0, j), **w_mode),    # W1 chunk
                pl.BlockSpec((1, th), lambda i, j: (0, j), **w_mode),    # b1 chunk
                pl.BlockSpec((th, D), lambda i, j: (j, 0), **w_mode),    # W2 chunk
                pl.BlockSpec((1, D), lambda i, j: (0, 0), **const_mode),  # b2
            ],
            out_specs=pl.BlockSpec((tm, D), lambda i, j: (i, 0)),
            scratch_shapes=[pltpu.VMEM((tm, D), jnp.float32)],
        ),
        compiler_params=pltpu.CompilerParams(
            dimension_semantics=("parallel", "arbitrary"),
            vmem_limit_bytes=vmem_bytes),
    )(x2d, w1, b1f, w2, b2f)

    return out2d.reshape(*lead_shape, D)


def init_params(key, input_dim):
    """Deterministic init matching torch.nn.Linear shapes.

    torch stores weight as (out, in); we keep (in, out) for row-major matmul.
    Uniform(-1/sqrt(fan_in), 1/sqrt(fan_in)) like PyTorch's default init.
    """
    output_dim = 4 * input_dim
    k1, k2, k3, k4 = jax.random.split(key, 4)
    bound1 = 1.0 / jnp.sqrt(input_dim)
    bound2 = 1.0 / jnp.sqrt(output_dim)
    w1 = jax.random.uniform(k1, (input_dim, output_dim), jnp.float32,
                            -bound1, bound1)
    b1 = jax.random.uniform(k2, (1, output_dim), jnp.float32, -bound1, bound1)
    w2 = jax.random.uniform(k3, (output_dim, input_dim), jnp.float32,
                            -bound2, bound2)
    b2 = jax.random.uniform(k4, (1, input_dim), jnp.float32, -bound2, bound2)
    return w1, b1, w2, b2


if __name__ == "__main__":
    key = jax.random.PRNGKey(0)
    batch, seq, input_dim = 2, 8, 32

    k_x, k_p = jax.random.split(key)
    x = jax.random.normal(k_x, (batch, seq, input_dim), jnp.float32)
    w1, b1, w2, b2 = init_params(k_p, input_dim)

    # Pure-JAX reference (exact erf-GELU, f32).
    h_ref = x.reshape(-1, input_dim) @ w1 + b1
    h_ref = 0.5 * h_ref * (1.0 + jax.lax.erf(h_ref / jnp.sqrt(2.0)))
    ref = (h_ref @ w2 + b2).reshape(batch, seq, input_dim)

    # f32 weight path: close to the f32 torch module (MXU default precision;
    # pass precision=jax.lax.Precision.HIGHEST for tighter f32 parity).
    out_f32 = jax.block_until_ready(feed_forward(x, w1, b1, w2, b2))
    assert out_f32.shape == (batch, seq, input_dim)
    assert jnp.allclose(out_f32, ref, atol=1e-5, rtol=1e-5)

    # bf16 weight path: weights pre-cast once via prepare_params (model-load
    # time), f32 accumulation in-kernel, looser tolerance.
    w1b, b1b, w2b, b2b = prepare_params(w1, b1, w2, b2, jnp.bfloat16)
    out_bf16 = jax.block_until_ready(feed_forward(x, w1b, b1b, w2b, b2b))
    assert out_bf16.shape == (batch, seq, input_dim)
    assert jnp.allclose(out_bf16.astype(jnp.float32), ref, atol=5e-2, rtol=5e-2)

    print("KERNEL_OK")
</pallas_src>

<mosaic_0001>
module attributes {stable_mosaic.version = 11 : i64} {
  func.func @_ffn_kernel(%arg0: i32, %arg1: i32, %arg2: memref<8x32xf32, #tpu.memory_space<vmem>>, %arg3: memref<32x128xf32, #tpu.memory_space<vmem>>, %arg4: memref<1x128xf32, #tpu.memory_space<vmem>>, %arg5: memref<128x32xf32, #tpu.memory_space<vmem>>, %arg6: memref<1x32xf32, #tpu.memory_space<vmem>>, %arg7: memref<8x32xf32, #tpu.memory_space<vmem>>, %arg8: memref<8x32xf32, #tpu.memory_space<vmem>>) attributes {dimension_semantics = [#tpu.dimension_semantics<parallel>, #tpu.dimension_semantics<arbitrary>], iteration_bounds = array<i64: 2, 1>, scalar_prefetch = 0 : i64, scratch_operands = 1 : i64, tpu.core_type = #tpu.core_type<tc>, window_params = [{transform_indices = @transform_0, window_bounds = array<i64: 8, 32>}, {pipeline_mode = #tpu.pipeline_mode<synchronous>, transform_indices = @transform_1, window_bounds = array<i64: 32, 128>}, {pipeline_mode = #tpu.pipeline_mode<synchronous>, transform_indices = @transform_2, window_bounds = array<i64: 1, 128>}, {pipeline_mode = #tpu.pipeline_mode<synchronous>, transform_indices = @transform_3, window_bounds = array<i64: 128, 32>}, {pipeline_mode = #tpu.pipeline_mode<synchronous>, transform_indices = @transform_4, window_bounds = array<i64: 1, 32>}, {transform_indices = @transform_5, window_bounds = array<i64: 8, 32>}]} {
    %c0 = arith.constant 0 : index
    %c0_0 = arith.constant 0 : index
    %0 = vector.load %arg2[%c0, %c0_0] : memref<8x32xf32, #tpu.memory_space<vmem>>, vector<8x32xf32>
    %c0_1 = arith.constant 0 : index
    %c0_2 = arith.constant 0 : index
    %1 = vector.load %arg3[%c0_1, %c0_2] : memref<32x128xf32, #tpu.memory_space<vmem>>, vector<32x128xf32>
    %cst = arith.constant dense<0.000000e+00> : vector<8x128xf32>
    %2 = tpu.matmul %0, %1, %cst {dimension_numbers = #tpu.dot_dimension_numbers<[1], [0], [0], [1], [0, 0, 1, 1], [], []>} : vector<8x32xf32>, vector<32x128xf32>, vector<8x128xf32> -> vector<8x128xf32>
    %c0_3 = arith.constant 0 : index
    %c0_4 = arith.constant 0 : index
    %3 = vector.load %arg4[%c0_3, %c0_4] : memref<1x128xf32, #tpu.memory_space<vmem>>, vector<1x128xf32>
    %4 = vector.broadcast %3 : vector<1x128xf32> to vector<8x128xf32>
    %5 = arith.addf %2, %4 : vector<8x128xf32>
    %cst_5 = arith.constant 5.000000e-01 : f32
    %6 = vector.broadcast %cst_5 : f32 to vector<8x128xf32>
    %7 = arith.mulf %6, %5 : vector<8x128xf32>
    %cst_6 = arith.constant 0.707106769 : f32
    %8 = vector.broadcast %cst_6 : f32 to vector<8x128xf32>
    %9 = arith.mulf %5, %8 : vector<8x128xf32>
    %10 = math.erf %9 : vector<8x128xf32>
    %cst_7 = arith.constant 1.000000e+00 : f32
    %11 = vector.broadcast %cst_7 : f32 to vector<8x128xf32>
    %12 = arith.addf %11, %10 : vector<8x128xf32>
    %13 = arith.mulf %7, %12 : vector<8x128xf32>
    %c0_8 = arith.constant 0 : index
    %c0_9 = arith.constant 0 : index
    %14 = vector.load %arg5[%c0_8, %c0_9] : memref<128x32xf32, #tpu.memory_space<vmem>>, vector<128x32xf32>
    %cst_10 = arith.constant dense<0.000000e+00> : vector<8x32xf32>
    %15 = tpu.matmul %13, %14, %cst_10 {dimension_numbers = #tpu.dot_dimension_numbers<[1], [0], [0], [1], [0, 0, 1, 1], [], []>} : vector<8x128xf32>, vector<128x32xf32>, vector<8x32xf32> -> vector<8x32xf32>
    %c0_11 = arith.constant 0 : index
    %c0_12 = arith.constant 0 : index
    %16 = vector.load %arg6[%c0_11, %c0_12] : memref<1x32xf32, #tpu.memory_space<vmem>>, vector<1x32xf32>
    %17 = vector.broadcast %16 : vector<1x32xf32> to vector<8x32xf32>
    %18 = arith.addf %15, %17 : vector<8x32xf32>
    %c0_13 = arith.constant 0 : index
    %c0_14 = arith.constant 0 : index
    %19 = vector.load %arg7[%c0_13, %c0_14] : memref<8x32xf32, #tpu.memory_space<vmem>>, vector<8x32xf32>
    tpu.vector_store %arg7[%c0_13, %c0_14], %18 {strides = array<i32>} : memref<8x32xf32, #tpu.memory_space<vmem>>, vector<8x32xf32>,
    return
  }
  func.func @transform_0(%arg0: i32, %arg1: i32) -> (i32, i32) {
    %c0_i32 = arith.constant 0 : i32
    %c0_i32_0 = arith.constant 0 : i32
    return %arg0, %c0_i32 : i32, i32
  }
  func.func @transform_1(%arg0: i32, %arg1: i32) -> (i32, i32) {
    %c0_i32 = arith.constant 0 : i32
    %c0_i32_0 = arith.constant 0 : i32
    return %c0_i32, %arg1 : i32, i32
  }
  func.func @transform_2(%arg0: i32, %arg1: i32) -> (i32, i32) {
    %c0_i32 = arith.constant 0 : i32
    %c0_i32_0 = arith.constant 0 : i32
    return %c0_i32, %arg1 : i32, i32
  }
  func.func @transform_3(%arg0: i32, %arg1: i32) -> (i32, i32) {
    %c0_i32 = arith.constant 0 : i32
    %c0_i32_0 = arith.constant 0 : i32
    return %arg1, %c0_i32 : i32, i32
  }
  func.func @transform_4(%arg0: i32, %arg1: i32) -> (i32, i32) {
    %c0_i32 = arith.constant 0 : i32
    %c0_i32_0 = arith.constant 0 : i32
    %c0_i32_1 = arith.constant 0 : i32
    return %c0_i32, %c0_i32_0 : i32, i32
  }
  func.func @transform_5(%arg0: i32, %arg1: i32) -> (i32, i32) {
    %c0_i32 = arith.constant 0 : i32
    %c0_i32_0 = arith.constant 0 : i32
    return %arg0, %c0_i32 : i32, i32
  }
}

</mosaic_0001>

<llo_original>
// kernel: feed_forward.1
$region0: #{feed_forward.1}
  #allocation0 [shape = 'u32[]', space=smem, size = 0x4, offset = 0x4, fixed_abs, tag = 'smem constant byte address 0x4 - core index']
  #allocation1 [shape = 'u32[144,128]{1,0:T(1,128)}', space=vmem, size = 0x12000, scoped, tag = 'internal scratch']
  #allocation2 [shape = 'f32[8,32]{1,0:T(8,128)}', space=vmem, size = 0x1000, scoped, tag = 'scratch operand']
  %s0 = inlined_call_operand.vmem [shape: f32[16,32], index: 0, kind: input, shape index: {}]
  %s1 = inlined_call_operand.vmem [shape: f32[32,128], index: 1, kind: input, shape index: {}]
  %s2 = inlined_call_operand.vmem [shape: f32[1,128], index: 2, kind: input, shape index: {}]
  %s3 = inlined_call_operand.vmem [shape: f32[128,32], index: 3, kind: input, shape index: {}]
  %s4 = inlined_call_operand.vmem [shape: f32[1,32], index: 4, kind: input, shape index: {}]
  %s5 = inlined_call_operand.hbm [shape: f32[16,32], index: 5, kind: output, shape index: {}]
  %s6 = sld [smem:[#allocation0]]
  $region53: #{feed_forward.1} parent=0
    _
  %s8 = ssub.s32 1, %s6
  %s9 = scalar_select 0, %s8, %s6
  $region1: #{feed_forward.1} parent=0
    #allocation3 [shape = 'u8[8192]{0}', space=vmem, size = 0x2000, scoped, tag = 'output window, operand 0']
    #allocation4 [shape = 's32[2]{0}', space=sflag, size = 0x8, scoped, tag = 'scoped memory for feed_forward.1']
    %10 = vsyncpa [#allocation4], 0
    %s11 = scalar_lea.sflag [#allocation4], 1
    %12 = vsyncpa %s11, 0
    loop: start=0, step=1, limit=4
    $region2: #{feed_forward.1} parent=1 // loop_pre_header
      _
    $region3: #{feed_forward.1} parent=1 // loop_header
      %s14 = sphi 0, %s18
      %p15 = scmp.ge.s32.totalorder %s14, 4
      %s21 = sphi 0, %s33
      %s22 = sphi 0, %s29
      %s23 = sphi 0, %s21
      %s24 = sphi 0, %s22
      %s25 = sphi 0, %s23
      %s26 = sphi 0, %s24
      %s36 = sphi 0, %s38
      %s39 = sphi 0, %s36
      %s40 = sphi 0, %s39
      %s56 = sphi 0, %s40
      %s62 = sphi 0, %s64
      %s65 = sphi 0, %s62
      %s66 = sphi 0, %s65
      %s82 = sphi 0, %s66
      %s88 = sphi 0, %s90
      %s91 = sphi 0, %s88
      %s92 = sphi 0, %s91
      %s108 = sphi 0, %s92
      %s114 = sphi 0, %s116
      %s117 = sphi 0, %s114
      %s118 = sphi 0, %s117
      %s134 = sphi 0, %s118
      %s138 = sphi 0, %s138
      %s140 = sphi 0, %s138
      %s141 = sphi 0, %s140
      %s155 = sphi 0, %s141
      %s161 = sphi 0, %s163
      %s164 = sphi 0, %s161
      %s165 = sphi 0, %s164
      %s181 = sphi 0, %s165
    $region4: #{feed_forward.1} parent=1 // loop_header_branch
      %17 = sbr.rel (%p15) target = $region8
    $region5: #{feed_forward.1} parent=1 // loop_body
      %s19 = ssub.s32 %s14, 1
      %s20 = ssub.s32 %s14, 2
      %s27 = sadd.s32 1, %s22
      %p28 = scmp.ge.s32.totalorder %s27, 1
      %s29 = scalar_select %p28, 0, %s27
      %s30 = sadd.s32 1, %s21
      %s31 = scalar_select %p28, %s30, %s21
      %p32 = scmp.ge.s32.totalorder %s31, 2
      %s33 = scalar_select %p32, 0, %s31
      %s34 = ssub.s32 %s21, %s33
      %p35 = scmp.eq.s32.totalorder %s34, 0
      %s37 = sadd.s32 %s36, 1
      %s38 = scalar_select %p35, %s36, %s37
      %p41 = pneg %p35
      %p42 = scmp.eq.s32.totalorder %s14, 1
      %p43 = por %p41, %p42
      %p44 = scmp.ne.s32.totalorder %s36, %s39
      %p45 = scmp.eq.s32.totalorder %s14, 0
      %p46 = por %p44, %p45
      %p47 = scmp.ne.s32.totalorder %s36, %s39
      %p48 = scmp.eq.s32.totalorder %s19, 1
      %p49 = por %p47, %p48
      %p50 = scmp.ne.s32.totalorder %s39, %s40
      %p51 = scmp.eq.s32.totalorder %s19, 0
      %p52 = por %p50, %p51
      %p53 = scmp.ne.s32.totalorder %s39, %s40
      %p54 = scmp.eq.s32.totalorder %s20, 1
      %p55 = por %p53, %p54
      %p57 = scmp.ne.s32.totalorder %s40, %s56
      %p58 = scmp.eq.s32.totalorder %s20, 0
      %p59 = por %p57, %p58
      %s60 = ssub.s32 %s22, %s29
      %p61 = scmp.eq.s32.totalorder %s60, 0
      %s63 = sadd.s32 %s62, 1
      %s64 = scalar_select %p61, %s62, %s63
      %p67 = pneg %p61
      %p68 = scmp.eq.s32.totalorder %s14, 1
      %p69 = por %p67, %p68
      %p70 = scmp.ne.s32.totalorder %s62, %s65
      %p71 = scmp.eq.s32.totalorder %s14, 0
      %p72 = por %p70, %p71
      %p73 = scmp.ne.s32.totalorder %s62, %s65
      %p74 = scmp.eq.s32.totalorder %s19, 1
      %p75 = por %p73, %p74
      %p76 = scmp.ne.s32.totalorder %s65, %s66
      %p77 = scmp.eq.s32.totalorder %s19, 0
      %p78 = por %p76, %p77
      %p79 = scmp.ne.s32.totalorder %s65, %s66
      %p80 = scmp.eq.s32.totalorder %s20, 1
      %p81 = por %p79, %p80
      %p83 = scmp.ne.s32.totalorder %s66, %s82
      %p84 = scmp.eq.s32.totalorder %s20, 0
      %p85 = por %p83, %p84
      %s86 = ssub.s32 %s22, %s29
      %p87 = scmp.eq.s32.totalorder %s86, 0
      %s89 = sadd.s32 %s88, 1
      %s90 = scalar_select %p87, %s88, %s89
      %p93 = pneg %p87
      %p94 = scmp.eq.s32.totalorder %s14, 1
      %p95 = por %p93, %p94
      %p96 = scmp.ne.s32.totalorder %s88, %s91
      %p97 = scmp.eq.s32.totalorder %s14, 0
      %p98 = por %p96, %p97
      %p99 = scmp.ne.s32.totalorder %s88, %s91
      %p100 = scmp.eq.s32.totalorder %s19, 1
      %p101 = por %p99, %p100
      %p102 = scmp.ne.s32.totalorder %s91, %s92
      %p103 = scmp.eq.s32.totalorder %s19, 0
      %p104 = por %p102, %p103
      %p105 = scmp.ne.s32.totalorder %s91, %s92
      %p106 = scmp.eq.s32.totalorder %s20, 1
      %p107 = por %p105, %p106
      %p109 = scmp.ne.s32.totalorder %s92, %s108
      %p110 = scmp.eq.s32.totalorder %s20, 0
      %p111 = por %p109, %p110
      %s112 = ssub.s32 %s22, %s29
      %p113 = scmp.eq.s32.totalorder %s112, 0
      %s115 = sadd.s32 %s114, 1
      %s116 = scalar_select %p113, %s114, %s115
      %p119 = pneg %p113
      %p120 = scmp.eq.s32.totalorder %s14, 1
      %p121 = por %p119, %p120
      %p122 = scmp.ne.s32.totalorder %s114, %s117
      %p123 = scmp.eq.s32.totalorder %s14, 0
      %p124 = por %p122, %p123
      %p125 = scmp.ne.s32.totalorder %s114, %s117
      %p126 = scmp.eq.s32.totalorder %s19, 1
      %p127 = por %p125, %p126
      %p128 = scmp.ne.s32.totalorder %s117, %s118
      %p129 = scmp.eq.s32.totalorder %s19, 0
      %p130 = por %p128, %p129
      %p131 = scmp.ne.s32.totalorder %s117, %s118
      %p132 = scmp.eq.s32.totalorder %s20, 1
      %p133 = por %p131, %p132
      %p135 = scmp.ne.s32.totalorder %s118, %s134
      %p136 = scmp.eq.s32.totalorder %s20, 0
      %p137 = por %p135, %p136
      %s139 = sadd.s32 %s138, 1
      %p142 = scmp.eq.s32.totalorder %s14, 1
      %p143 = scmp.ne.s32.totalorder %s138, %s140
      %p144 = scmp.eq.s32.totalorder %s14, 0
      %p145 = por %p143, %p144
      %p146 = scmp.ne.s32.totalorder %s138, %s140
      %p147 = scmp.eq.s32.totalorder %s19, 1
      %p148 = por %p146, %p147
      %p149 = scmp.ne.s32.totalorder %s140, %s141
      %p150 = scmp.eq.s32.totalorder %s19, 0
      %p151 = por %p149, %p150
      %p152 = scmp.ne.s32.totalorder %s140, %s141
      %p153 = scmp.eq.s32.totalorder %s20, 1
      %p154 = por %p152, %p153
      %p156 = scmp.ne.s32.totalorder %s141, %s155
      %p157 = scmp.eq.s32.totalorder %s20, 0
      %p158 = por %p156, %p157
      %s159 = ssub.s32 %s21, %s33
      %p160 = scmp.eq.s32.totalorder %s159, 0
      %s162 = sadd.s32 %s161, 1
      %s163 = scalar_select %p160, %s161, %s162
      %p166 = pneg %p160
      %p167 = scmp.eq.s32.totalorder %s14, 1
      %p168 = por %p166, %p167
      %p169 = scmp.ne.s32.totalorder %s161, %s164
      %p170 = scmp.eq.s32.totalorder %s14, 0
      %p171 = por %p169, %p170
      %p172 = scmp.ne.s32.totalorder %s161, %s164
      %p173 = scmp.eq.s32.totalorder %s19, 1
      %p174 = por %p172, %p173
      %p175 = scmp.ne.s32.totalorder %s164, %s165
      %p176 = scmp.eq.s32.totalorder %s19, 0
      %p177 = por %p175, %p176
      %p178 = scmp.ne.s32.totalorder %s164, %s165
      %p179 = scmp.eq.s32.totalorder %s20, 1
      %p180 = por %p178, %p179
      %p182 = scmp.ne.s32.totalorder %s165, %s181
      %p183 = scmp.eq.s32.totalorder %s20, 0
      %p184 = por %p182, %p183
      %p185 = scmp.le.s32.totalorder 1, %s14
      %p186 = scmp.lt.s32.totalorder %s14, 3
      %p187 = pnand %p185, %p186
      %p188 = pneg %p187
      // Predicated region
      $region9: #{feed_forward.1} parent=5 // pred_check
        _
      $region10: #{feed_forward.1} parent=5 // pred_check_branch
        %190 = sbr.rel (%p187) target = $region12
      $region11: #{feed_forward.1} parent=5 // pred_region
        %s191 = ssub.s32 %s14, 1
        // Predicated region
        $region13: #{feed_forward.1} parent=11 // pred_check
          %p192 = pneg %p78
        $region14: #{feed_forward.1} parent=11 // pred_check_branch
          %194 = sbr.rel (%p192) target = $region16
        $region15: #{feed_forward.1} parent=11 // pred_region
          %p195 = scmp.lt.s32.totalorder %s24, 0
          %s196 = scalar_select %p195, %s24, 0
          %s197 = smul.addr %s196, 8
          %s198 = scalar_lea.vmem %s1, %s197
        $region16: #{feed_forward.1} parent=11 // pred_fallthru
          _
        // Predicated region
        $region17: #{feed_forward.1} parent=11 // pred_check
          %p199 = pneg %p104
        $region18: #{feed_forward.1} parent=11 // pred_check_branch
          %201 = sbr.rel (%p199) target = $region20
        $region19: #{feed_forward.1} parent=11 // pred_region
          %p202 = scmp.lt.s32.totalorder %s24, 0
          %s203 = scalar_select %p202, %s24, 0
          %s204 = scalar_lea.vmem %s2, %s203
        $region20: #{feed_forward.1} parent=11 // pred_fallthru
          _
        // Predicated region
        $region21: #{feed_forward.1} parent=11 // pred_check
          %p205 = pneg %p130
        $region22: #{feed_forward.1} parent=11 // pred_check_branch
          %207 = sbr.rel (%p205) target = $region24
        $region23: #{feed_forward.1} parent=11 // pred_region
          %s208 = smul.u32 16, %s24
          %p209 = scmp.lt.s32.totalorder %s208, 15
          %s210 = scalar_select %p209, %s208, 15
          %s211 = smul.addr %s210, 8
          %s212 = scalar_lea.vmem %s3, %s211
          %s213 = smul.u32 16, %s24
        $region24: #{feed_forward.1} parent=11 // pred_fallthru
          _
        // Predicated region
        $region25: #{feed_forward.1} parent=11 // pred_check
          %p214 = pneg %p151
        $region26: #{feed_forward.1} parent=11 // pred_check_branch
          %216 = sbr.rel (%p214) target = $region28
        $region27: #{feed_forward.1} parent=11 // pred_region
          _
        $region28: #{feed_forward.1} parent=11 // pred_fallthru
          _
      $region12: #{feed_forward.1} parent=5 // pred_fallthru
        _
      %p217 = scmp.lt.s32.totalorder %s14, 2
      // Predicated region
      $region29: #{feed_forward.1} parent=5 // pred_check
        %p218 = pneg %p217
      $region30: #{feed_forward.1} parent=5 // pred_check_branch
        %220 = sbr.rel (%p218) target = $region32
      $region31: #{feed_forward.1} parent=5 // pred_region
        // Predicated region
        $region33: #{feed_forward.1} parent=31 // pred_check
          %p221 = pneg %p46
        $region34: #{feed_forward.1} parent=31 // pred_check_branch
          %223 = sbr.rel (%p221) target = $region36
        $region35: #{feed_forward.1} parent=31 // pred_region
          %p224 = scmp.lt.s32.totalorder %s21, 1
          %s225 = scalar_select %p224, %s21, 1
          %s226 = smul.addr %s225, 8
          %s227 = scalar_lea.vmem %s0, %s226
        $region36: #{feed_forward.1} parent=31 // pred_fallthru
          _
      $region32: #{feed_forward.1} parent=5 // pred_fallthru
        _
      %p228 = scmp.le.s32.totalorder 1, %s14
      %p229 = scmp.lt.s32.totalorder %s14, 3
      %p230 = pnand %p228, %p229
      %p231 = pneg %p230
      // Predicated region
      $region37: #{feed_forward.1} parent=5 // pred_check
        _
      $region38: #{feed_forward.1} parent=5 // pred_check_branch
        %233 = sbr.rel (%p230) target = $region40
      $region39: #{feed_forward.1} parent=5 // pred_region
        %s234 = ssub.s32 %s14, 1
        %p235 = scmp.lt.s32.totalorder %s23, 1
        %s236 = scalar_select %p235, %s23, 1
        %s237 = smul.addr %s236, 8
        %s238 = scalar_lea.vmem %s0, %s237
        %p239 = pneg %p52
        %p240 = pneg %p49
        %p241 = scmp.lt.s32.totalorder %s24, 0
        %s242 = scalar_select %p241, %s24, 0
        %s243 = smul.addr %s242, 8
        %s244 = scalar_lea.vmem %s1, %s243
        %p245 = pneg %p78
        %p246 = pneg %p75
        %p247 = scmp.lt.s32.totalorder %s24, 0
        %s248 = scalar_select %p247, %s24, 0
        %s249 = scalar_lea.vmem %s2, %s248
        %p250 = pneg %p104
        %p251 = pneg %p101
        %s252 = smul.u32 16, %s24
        %p253 = scmp.lt.s32.totalorder %s252, 15
        %s254 = scalar_select %p253, %s252, 15
        %s255 = smul.addr %s254, 8
        %s256 = scalar_lea.vmem %s3, %s255
        %p257 = pneg %p130
        %p258 = pneg %p127
        %p259 = pneg %p151
        %p260 = pneg %p148
        %p261 = pneg %p177
        %p262 = pneg %p174
        %s263 = sand.u32 %s164, 1
        %s264 = scalar_lea.sflag [#allocation4], %s263
        %s265 = sand.u32 %s164, 1
        %s266 = smul.addr %s265, 8
        %s267 = scalar_lea.vmem [#allocation3], %s266
        %p268 = scmp.lt.s32.totalorder %s23, 1
        %s269 = scalar_select %p268, %s23, 1
        %s270 = smul.addr %s269, 8
        %s271 = scalar_lea.vmem %s0, %s270
        %p272 = scmp.lt.s32.totalorder %s24, 0
        %s273 = scalar_select %p272, %s24, 0
        %s274 = smul.addr %s273, 8
        %s275 = scalar_lea.vmem %s1, %s274
        %p276 = scmp.lt.s32.totalorder %s24, 0
        %s277 = scalar_select %p276, %s24, 0
        %s278 = scalar_lea.vmem %s2, %s277
        %s279 = smul.u32 16, %s24
        %p280 = scmp.lt.s32.totalorder %s279, 15
        %s281 = scalar_select %p280, %s279, 15
        %s282 = smul.addr %s281, 8
        %s283 = scalar_lea.vmem %s3, %s282
        %s284 = smul.u32 16, %s24
        %v285 = vld [vmem:[%s271] sm:$0xff]
        %v286 = vld [vmem:[%s275] sm:$0xff]
        %v287 = vld [vmem:[%s275 + $0x8] sm:$0xff]
        %v288 = vld [vmem:[%s275 + $0x10] sm:$0xff]
        %v289 = vld [vmem:[%s275 + $0x18] sm:$0xff]
        %v290 = vld [vmem:[%s278] sm:$0x1]
        %v292 = vlaneseq
        %v293 = vshrl.u32 %v292, 7
        %v294 = vsub.s32 0, %v293
        %v295 = vrot.slane %v290, %v294
        %vm297 = vcmask 261120
        %v299 = vsel %vm297, %v285, 0
        %301 = vmatprep.subr.mxu0 0.0
        %302 = vmatpush1.msra.mxu0 0.0
        %303 = vmatprep.subr.mxu0 0.0
        %304 = vmatpush1.msra.mxu0 0.0
        %305 = vmatprep.subr.mxu0 0.0
        %306 = vmatpush1.msra.mxu0 0.0
        %307 = vmatprep.subr.mxu0 0.0
        %308 = vmatpush1.msra.mxu0 0.0
        %309 = vmatprep.subr.mxu0 0.0
        %310 = vmatpush1.msra.mxu0 0.0
        %311 = vmatprep.subr.mxu0 0.0
        %312 = vmatpush1.msra.mxu0 0.0
        %313 = vmatprep.subr.mxu0 0.0
        %314 = vmatpush1.msra.mxu0 0.0
        %315 = vmatprep.subr.mxu0 0.0
        %316 = vmatpush1.msra.mxu0 0.0
        %317 = vmatprep.subr.mxu0 0.0
        %318 = vmatpush1.msra.mxu0 0.0
        %319 = vmatprep.subr.mxu0 0.0
        %320 = vmatpush1.msra.mxu0 0.0
        %321 = vmatprep.subr.mxu0 0.0
        %322 = vmatpush1.msra.mxu0 0.0
        %323 = vmatprep.subr.mxu0 0.0
        %324 = vmatpush1.msra.mxu0 0.0
        %325 = vmatprep.subr.mxu0 0.0
        %326 = vmatpush1.msra.mxu0 %v289
        %327 = vmatprep.subr.mxu0 0.0
        %328 = vmatpush1.msra.mxu0 %v288
        %329 = vmatprep.subr.mxu0 0.0
        %330 = vmatpush1.msra.mxu0 %v287
        %331 = vmatprep.subr.mxu0 0.0
        %332 = vmatpush1.msra.mxu0 %v286
        %333 = vmatprep.subr.mxu0 0.0
        %334 = vmatpush2.msra.mxu0 0.0
        %335 = vmatprep.subr.mxu0 0.0
        %336 = vmatpush2.msra.mxu0 0.0
        %337 = vmatprep.subr.mxu0 0.0
        %338 = vmatpush2.msra.mxu0 0.0
        %339 = vmatprep.subr.mxu0 0.0
        %340 = vmatpush2.msra.mxu0 0.0
        %341 = vmatprep.subr.mxu0 0.0
        %342 = vmatpush2.msra.mxu0 0.0
        %343 = vmatprep.subr.mxu0 0.0
        %344 = vmatpush2.msra.mxu0 0.0
        %345 = vmatprep.subr.mxu0 0.0
        %346 = vmatpush2.msra.mxu0 0.0
        %347 = vmatprep.subr.mxu0 0.0
        %348 = vmatpush2.msra.mxu0 0.0
        %349 = vmatprep.subr.mxu0 0.0
        %350 = vmatpush2.msra.mxu0 0.0
        %351 = vmatprep.subr.mxu0 0.0
        %352 = vmatpush2.msra.mxu0 0.0
        %353 = vmatprep.subr.mxu0 0.0
        %354 = vmatpush2.msra.mxu0 0.0
        %355 = vmatprep.subr.mxu0 0.0
        %356 = vmatpush2.msra.mxu0 0.0
        %357 = vmatprep.subr.mxu0 0.0
        %358 = vmatpush2.msra.mxu0 0.0
        %359 = vmatprep.subr.mxu0 0.0
        %360 = vmatpush2.msra.mxu0 0.0
        %361 = vmatprep.subr.mxu0 0.0
        %362 = vmatpush2.msra.mxu0 0.0
        %363 = vmatprep.subr.mxu0 0.0
        %364 = vmatpush2.msra.mxu0 0.0
        %365 = vmatprep.mubr.f32.mxu0 0.0
        %366 = vmatmul.mubr.f32.gmra.mxu0 %v299
        %v367 = vpop.f32.mrf.mxu0
        %v368 = vadd.f32 %v295, %v367
        %v369 = vpop.f32.mrf.mxu0
        %370 = vdwg.mxu0
        %v371 = vmul.f32 %v368, 0.5
        %v372 = vmul.f32 %v368, 0.70710677
        %v373 = verf.f32.pop %v372
        %v374 = vadd.f32 %v373, 1.0
        %v375 = vmul.f32 %v371, %v374
        %v376 = vld [vmem:[%s283] sm:$0xff]
        %v377 = vld [vmem:[%s283 + $0x8] sm:$0xff]
        %v378 = vld [vmem:[%s283 + $0x10] sm:$0xff]
        %v379 = vld [vmem:[%s283 + $0x18] sm:$0xff]
        %v380 = vld [vmem:[%s283 + $0x20] sm:$0xff]
        %v381 = vld [vmem:[%s283 + $0x28] sm:$0xff]
        %v382 = vld [vmem:[%s283 + $0x30] sm:$0xff]
        %v383 = vld [vmem:[%s283 + $0x38] sm:$0xff]
        %v384 = vld [vmem:[%s283 + $0x40] sm:$0xff]
        %v385 = vld [vmem:[%s283 + $0x48] sm:$0xff]
        %v386 = vld [vmem:[%s283 + $0x50] sm:$0xff]
        %v387 = vld [vmem:[%s283 + $0x58] sm:$0xff]
        %v388 = vld [vmem:[%s283 + $0x60] sm:$0xff]
        %v389 = vld [vmem:[%s283 + $0x68] sm:$0xff]
        %v390 = vld [vmem:[%s283 + $0x70] sm:$0xff]
        %v391 = vld [vmem:[%s283 + $0x78] sm:$0xff]
        %v392 = vld [vmem:[%s4] sm:$0x1]
        %v394 = vlaneseq
        %v395 = vshrl.u32 %v394, 7
        %v396 = vsub.s32 0, %v395
        %v397 = vrot.slane %v392, %v396
        %399 = vmatprep.subr.mxu0 0.0
        %400 = vmatpush1.msra.mxu0 %v391
        %401 = vmatprep.subr.mxu0 0.0
        %402 = vmatpush1.msra.mxu0 %v390
        %403 = vmatprep.subr.mxu0 0.0
        %404 = vmatpush1.msra.mxu0 %v389
        %405 = vmatprep.subr.mxu0 0.0
        %406 = vmatpush1.msra.mxu0 %v388
        %407 = vmatprep.subr.mxu0 0.0
        %408 = vmatpush1.msra.mxu0 %v387
        %409 = vmatprep.subr.mxu0 0.0
        %410 = vmatpush1.msra.mxu0 %v386
        %411 = vmatprep.subr.mxu0 0.0
        %412 = vmatpush1.msra.mxu0 %v385
        %413 = vmatprep.subr.mxu0 0.0
        %414 = vmatpush1.msra.mxu0 %v384
        %415 = vmatprep.subr.mxu0 0.0
        %416 = vmatpush1.msra.mxu0 %v383
        %417 = vmatprep.subr.mxu0 0.0
        %418 = vmatpush1.msra.mxu0 %v382
        %419 = vmatprep.subr.mxu0 0.0
        %420 = vmatpush1.msra.mxu0 %v381
        %421 = vmatprep.subr.mxu0 0.0
        %422 = vmatpush1.msra.mxu0 %v380
        %423 = vmatprep.subr.mxu0 0.0
        %424 = vmatpush1.msra.mxu0 %v379
        %425 = vmatprep.subr.mxu0 0.0
        %426 = vmatpush1.msra.mxu0 %v378
        %427 = vmatprep.subr.mxu0 0.0
        %428 = vmatpush1.msra.mxu0 %v377
        %429 = vmatprep.subr.mxu0 0.0
        %430 = vmatpush1.msra.mxu0 %v376
        %431 = vmatprep.subr.mxu0 0.0
        %432 = vmatpush2.msra.mxu0 0.0
        %433 = vmatprep.subr.mxu0 0.0
        %434 = vmatpush2.msra.mxu0 0.0
        %435 = vmatprep.subr.mxu0 0.0
        %436 = vmatpush2.msra.mxu0 0.0
        %437 = vmatprep.subr.mxu0 0.0
        %438 = vmatpush2.msra.mxu0 0.0
        %439 = vmatprep.subr.mxu0 0.0
        %440 = vmatpush2.msra.mxu0 0.0
        %441 = vmatprep.subr.mxu0 0.0
        %442 = vmatpush2.msra.mxu0 0.0
        %443 = vmatprep.subr.mxu0 0.0
        %444 = vmatpush2.msra.mxu0 0.0
        %445 = vmatprep.subr.mxu0 0.0
        %446 = vmatpush2.msra.mxu0 0.0
        %447 = vmatprep.subr.mxu0 0.0
        %448 = vmatpush2.msra.mxu0 0.0
        %449 = vmatprep.subr.mxu0 0.0
        %450 = vmatpush2.msra.mxu0 0.0
        %451 = vmatprep.subr.mxu0 0.0
        %452 = vmatpush2.msra.mxu0 0.0
        %453 = vmatprep.subr.mxu0 0.0
        %454 = vmatpush2.msra.mxu0 0.0
        %455 = vmatprep.subr.mxu0 0.0
        %456 = vmatpush2.msra.mxu0 0.0
        %457 = vmatprep.subr.mxu0 0.0
        %458 = vmatpush2.msra.mxu0 0.0
        %459 = vmatprep.subr.mxu0 0.0
        %460 = vmatpush2.msra.mxu0 0.0
        %461 = vmatprep.subr.mxu0 0.0
        %462 = vmatpush2.msra.mxu0 0.0
        %463 = vmatprep.mubr.f32.mxu0 0.0
        %464 = vmatmul.mubr.f32.gmra.mxu0 %v375
        %v465 = vpop.f32.mrf.mxu0
        %v466 = vadd.f32 %v397, %v465
        %v467 = vpop.f32.mrf.mxu0
        %468 = vdwg.mxu0
        %469 = vst.msk [vmem:[%s267] sm:$0xff] %vm297, %v466
        %s470 = sand.u32 %s164, 1
        %s471 = scalar_lea.sflag [#allocation4], %s470
        %s472 = sand.u32 %s164, 1
        %s473 = smul.addr %s472, 8
        %s474 = scalar_lea.vmem [#allocation3], %s473
        // Predicated region
        $region41: #{feed_forward.1} parent=39 // pred_check
          %p475 = pneg %p174
        $region42: #{feed_forward.1} parent=39 // pred_check_branch
          %477 = sbr.rel (%p475) target = $region44
        $region43: #{feed_forward.1} parent=39 // pred_region
          %s479 = ssub.s32 128, 128
          %480 = vsyncadd %s471, %s479
          %s481 = smul.addr %s23, 128
          %s482 = scalar_lea.hbm %s5, %s481
          %s484 = sshll.u32 %s474, 4
          %s485 = int_to_ptr.vmem [resolvable:$true] %s484
          %487 = dma.vmem_to_hbm [thread:$0]  %s485, 128, %s482, %s471
        $region44: #{feed_forward.1} parent=39 // pred_fallthru
          _
      $region40: #{feed_forward.1} parent=5 // pred_fallthru
        _
      %p488 = scmp.le.s32.totalorder 2, %s14
      // Predicated region
      $region45: #{feed_forward.1} parent=5 // pred_check
        %p489 = pneg %p488
      $region46: #{feed_forward.1} parent=5 // pred_check_branch
        %491 = sbr.rel (%p489) target = $region48
      $region47: #{feed_forward.1} parent=5 // pred_region
        %s492 = ssub.s32 %s14, 2
        // Predicated region
        $region49: #{feed_forward.1} parent=47 // pred_check
          %p493 = pneg %p180
        $region50: #{feed_forward.1} parent=47 // pred_check_branch
          %495 = sbr.rel (%p493) target = $region52
        $region51: #{feed_forward.1} parent=47 // pred_region
          %s496 = sand.u32 %s165, 1
          %s497 = scalar_lea.sflag [#allocation4], %s496
          %s498 = sand.u32 %s165, 1
          %s499 = smul.addr %s498, 8
          %s500 = scalar_lea.vmem [#allocation3], %s499
          %501 = dma.done %s497, 128
        $region52: #{feed_forward.1} parent=47 // pred_fallthru
          _
      $region48: #{feed_forward.1} parent=5 // pred_fallthru
        _
    $region6: #{feed_forward.1} parent=1 // loop_footer
      %s18 = sadd.s32 1, %s14
    $region7: #{feed_forward.1} parent=1 // loop_footer_branch
      %13 = sbr.rel target = $region3
    $region8: #{feed_forward.1} parent=1 // loop_exit
      _
    %502 = vsyncpa [#allocation4], 1
    %s503 = scalar_lea.sflag [#allocation4], 1
    %504 = vsyncpa %s503, 1

</llo_original>
